<compile_context>
chip_gen: v7x
topology: tpu7x:2x2x1
jax: 0.10.0
libtpu: 0.0.40
codegen_flags: <defaults>
</compile_context>

<pallas_src>
import functools
import math

import jax
import jax.numpy as jnp
from jax.experimental import pallas as pl
from jax.experimental.pallas import tpu as pltpu


# ----------------------------------------------------------------------------- helpers ----
def _const_spec(shape, single_buffer):
    """BlockSpec for an operand whose block is identical at every grid step."""
    index_map = lambda *_: (0,) * len(shape)
    if single_buffer:
        # Constant blocks never change -> no benefit from double-buffering them.
        return pl.BlockSpec(shape, index_map, pipeline_mode=pl.Buffered(1))
    return pl.BlockSpec(shape, index_map)


def _vmem_limit(est_bytes):
    # Floor at the 32 MiB default scoped limit; keep headroom under v7x's 64 MiB/TC.
    return int(min(64 * 1024 * 1024, max(32 * 1024 * 1024, int(1.5 * est_bytes))))


# ------------------------------------------------------------------- QKV projection kernel
def _qkv_projection_kernel(x_ref, wqkv_ref, bqkv_ref, q_ref, k_ref, v_ref,
                           *, hidden, compute_dtype):
    # One fused (rows, H) x (H, 3H) MXU matmul; 1/sqrt(head_dim) is already folded into the
    # Q columns of wqkv / bqkv (one-time parameter transform in the wrapper).
    x_c = x_ref[...].astype(compute_dtype)
    qkv = jnp.dot(x_c, wqkv_ref[...], preferred_element_type=jnp.float32) + bqkv_ref[0]
    # Splits at multiples of H (lane-aligned whenever H % 128 == 0).
    q_ref[...] = qkv[:, :hidden].astype(q_ref.dtype)
    k_ref[...] = qkv[:, hidden:2 * hidden].astype(k_ref.dtype)
    v_ref[...] = qkv[:, 2 * hidden:].astype(v_ref.dtype)


def _project_qkv(x2d, wqkv, bqkv, *, compute_dtype, single_buffer):
    rows, hidden = x2d.shape
    if rows % 512 == 0:
        row_block = 512
    elif rows % 256 == 0:
        row_block = 256
    elif rows % 128 == 0:
        row_block = 128
    else:
        row_block = rows

    cbytes = jnp.dtype(compute_dtype).itemsize
    wbuf = 1 if single_buffer else 2
    est = (wbuf * (wqkv.size * cbytes + bqkv.size * 4)
           + 2 * (row_block * hidden * 4 + 3 * row_block * hidden * cbytes)
           + row_block * 3 * hidden * 4)
    cost = pl.CostEstimate(
        flops=int(2 * rows * hidden * 3 * hidden),
        transcendentals=0,
        bytes_accessed=int(x2d.size * 4 + wqkv.size * cbytes + bqkv.size * 4
                           + 3 * rows * hidden * cbytes),
    )

    out_sds = jax.ShapeDtypeStruct((rows, hidden), compute_dtype)
    kernel = functools.partial(_qkv_projection_kernel, hidden=hidden,
                               compute_dtype=compute_dtype)
    return pl.pallas_call(
        kernel,
        out_shape=(out_sds, out_sds, out_sds),
        grid_spec=pltpu.PrefetchScalarGridSpec(
            num_scalar_prefetch=0,
            grid=(rows // row_block,),
            in_specs=[
                pl.BlockSpec((row_block, hidden), lambda r: (r, 0)),
                _const_spec((hidden, 3 * hidden), single_buffer),
                _const_spec((1, 3 * hidden), single_buffer),
            ],
            out_specs=(pl.BlockSpec((row_block, hidden), lambda r: (r, 0)),
                       pl.BlockSpec((row_block, hidden), lambda r: (r, 0)),
                       pl.BlockSpec((row_block, hidden), lambda r: (r, 0))),
        ),
        compiler_params=pltpu.CompilerParams(
            dimension_semantics=("parallel",),
            vmem_limit_bytes=_vmem_limit(est)),
        cost_estimate=cost,
    )(x2d, wqkv, bqkv)


# ------------------------------------------------------ attention + dense + LayerNorm kernel
def _attention_kernel(q_ref, k_ref, v_ref, mask_ref, x_ref,
                      wo_ref, bo_ref, gamma_ref, beta_ref, out_ref,
                      *, eps, compute_dtype, approx_recip):
    q = q_ref[0]                         # (nh, qb, d)  compute_dtype (scale already folded)
    k = k_ref[0]                         # (nh, S,  d)
    v = v_ref[0]                         # (nh, S,  d)

    # Batched-head scores: 'hqd,hkd->hqk' on the MXU, f32 accumulation.
    s = jax.lax.dot_general(q, k, (((2,), (2,)), ((0,), (0,))),
                            preferred_element_type=jnp.float32)        # (nh, qb, S)
    s = s + mask_ref[0]                                                 # (1, qb, S) broadcast

    # Numerically stable softmax; divide replaced by EUP reciprocal on the bf16 path.
    m = jnp.max(s, axis=-1, keepdims=True)
    p = jnp.exp(s - m)
    denom = jnp.sum(p, axis=-1, keepdims=True)
    probs = p * pl.reciprocal(denom, approx=approx_recip)

    # Batched-head context: 'hqk,hkd->hqd'.
    ctx = jax.lax.dot_general(probs.astype(compute_dtype), v,
                              (((2,), (1,)), ((0,), (0,))),
                              preferred_element_type=jnp.float32)       # (nh, qb, d)

    # Output projection with head-merge folded in: Wo reshaped to (nh, d, H);
    # batched 'hqd,hdn->hqn' then sum over heads (pure VPU adds) — no in-kernel transpose,
    # and the (qb, H) result is written lane-dense.
    dense_h = jax.lax.dot_general(ctx.astype(compute_dtype), wo_ref[...],
                                  (((2,), (1,)), ((0,), (0,))),
                                  preferred_element_type=jnp.float32)   # (nh, qb, H)
    dense = jnp.sum(dense_h, axis=0) + bo_ref[0]                        # (qb, H)

    # Residual + LayerNorm in f32.
    res = dense + x_ref[0]
    mean = jnp.mean(res, axis=-1, keepdims=True)
    cen = res - mean
    var = jnp.mean(cen * cen, axis=-1, keepdims=True)
    normed = cen * jax.lax.rsqrt(var + eps)
    out_ref[0] = (normed * gamma_ref[0] + beta_ref[0]).astype(out_ref.dtype)


# --------------------------------------------------------------------------------- forward
def _forward(x, attention_mask, params, *, num_heads, eps, compute_dtype, q_block,
             out_dtype, single_buffer):
    B, S, H = x.shape
    assert H % num_heads == 0
    nh = num_heads
    d = H // nh

    if q_block is None:
        # 256-row q-blocks fill the 256-wide MXU output tile on v6e/v7x; v5e's 128x128 MXU
        # is matched by 128.  The VMEM budget below keeps either choice inside v7x's 64 MiB.
        if S % 256 == 0:
            q_block = 256
        elif S % 128 == 0:
            q_block = 128
        else:
            q_block = S
    assert S % q_block == 0
    nq = S // q_block

    # --- one-time (H, H)-sized parameter transforms (not activation-sized work) ---
    scale = 1.0 / math.sqrt(d)
    wqkv = jnp.concatenate([params["wq"] * scale, params["wk"], params["wv"]],
                           axis=1).astype(compute_dtype)                 # (H, 3H)
    bqkv = jnp.concatenate([params["bq"] * scale, params["bk"], params["bv"]],
                           axis=1).astype(jnp.float32)                   # (1, 3H)
    wo_h = params["wo"].astype(compute_dtype).reshape(nh, d, H)          # row h*d+j -> [h, j, :]
    bo = params["bo"].astype(jnp.float32)
    gamma = params["gamma"].astype(jnp.float32)
    beta = params["beta"].astype(jnp.float32)
    x = x.astype(jnp.float32)
    attention_mask = attention_mask.astype(jnp.float32)

    # --- stage 1: fused QKV projection (its own pallas_call so the attention grid carries
    #     no scratch state and both of its axes can be 'parallel' for megacore) ---
    q2d, k2d, v2d = _project_qkv(x.reshape(B * S, H), wqkv, bqkv,
                                 compute_dtype=compute_dtype, single_buffer=single_buffer)

    def to_heads(t):   # (B*S, H) -> (B, nh, S, d): head-major so the attention kernel does
        return t.reshape(B, S, nh, d).transpose(0, 2, 1, 3)   # batched matmuls, no relayout
    qh, kh, vh = to_heads(q2d), to_heads(k2d), to_heads(v2d)

    # --- stage 2: attention + output dense + residual + LayerNorm ---
    cbytes = jnp.dtype(compute_dtype).itemsize
    obytes = jnp.dtype(out_dtype).itemsize
    wbuf = 1 if single_buffer else 2
    est = (wbuf * (nh * d * H * cbytes + 3 * H * 4)
           + 2 * (nh * q_block * d * cbytes + 2 * nh * S * d * cbytes
                  + q_block * S * 4 + q_block * H * 4 + q_block * H * obytes)
           + 2 * nh * q_block * S * 4 + nh * q_block * H * 4)            # score/prob/dense temps
    flops = 4 * B * nh * S * S * d + 2 * B * S * H * H + 12 * B * S * H
    transcendentals = B * nh * S * S + B * S * (nh + 1)
    bytes_accessed = (3 * B * nh * S * d * cbytes + B * S * S * 4 + B * S * H * 4
                      + B * S * H * obytes + nh * d * H * cbytes + 6 * H * 4)
    cost = pl.CostEstimate(flops=int(flops), transcendentals=int(transcendentals),
                           bytes_accessed=int(bytes_accessed))

    # Exact divide only when running the strict-parity f32 path; bf16 uses the EUP vrcp.
    approx_recip = jnp.dtype(compute_dtype) != jnp.dtype(jnp.float32)
    kernel = functools.partial(_attention_kernel, eps=eps, compute_dtype=compute_dtype,
                               approx_recip=approx_recip)

    return pl.pallas_call(
        kernel,
        out_shape=jax.ShapeDtypeStruct((B, S, H), out_dtype),
        grid_spec=pltpu.PrefetchScalarGridSpec(
            num_scalar_prefetch=0,
            grid=(B, nq),
            in_specs=[
                pl.BlockSpec((1, nh, q_block, d), lambda b, qi: (b, 0, qi, 0)),  # Q block
                pl.BlockSpec((1, nh, S, d), lambda b, qi: (b, 0, 0, 0)),         # K (resident per b)
                pl.BlockSpec((1, nh, S, d), lambda b, qi: (b, 0, 0, 0)),         # V (resident per b)
                pl.BlockSpec((1, 1, q_block, S), lambda b, qi: (b, 0, qi, 0)),   # additive mask tile
                pl.BlockSpec((1, q_block, H), lambda b, qi: (b, qi, 0)),         # residual rows
                _const_spec((nh, d, H), single_buffer),                          # Wo (head-major)
                _const_spec((1, H), single_buffer),                              # bo
                _const_spec((1, H), single_buffer),                              # gamma
                _const_spec((1, H), single_buffer),                              # beta
            ],
            out_specs=pl.BlockSpec((1, q_block, H), lambda b, qi: (b, qi, 0)),
        ),
        compiler_params=pltpu.CompilerParams(
            dimension_semantics=("parallel", "parallel"),
            vmem_limit_bytes=_vmem_limit(est)),
        cost_estimate=cost,
    )(qh, kh, vh, attention_mask, x, wo_h, bo, gamma, beta)


def euclidean_attention(x, attention_mask, params, *, num_heads, eps=1e-12,
                        compute_dtype=jnp.bfloat16, q_block=None, out_dtype=jnp.float32,
                        single_buffer_weights=True):
    """x: (B, S, H); attention_mask: (B, 1, S, S) additive mask (0 = keep, -1e4 = masked)."""
    kwargs = dict(num_heads=num_heads, eps=eps, compute_dtype=compute_dtype,
                  q_block=q_block, out_dtype=out_dtype)
    if single_buffer_weights:
        try:
            return _forward(x, attention_mask, params, single_buffer=True, **kwargs)
        except Exception:
            # pl.Buffered(1) single-buffering unsupported on this jax/libtpu combo:
            # retry with default double-buffered constant operands (identical numerics).
            pass
    return _forward(x, attention_mask, params, single_buffer=False, **kwargs)


# ------------------------------------------------------------------------------- reference
def _reference(x, attention_mask, params, *, num_heads, eps=1e-12):
    """Pure-JAX f32 reference mirroring the PyTorch module (eval mode)."""
    B, S, H = x.shape
    d = H // num_heads

    def lin(v, w, b):
        return v @ w + b[0]

    q = lin(x, params["wq"], params["bq"]).reshape(B, S, num_heads, d).transpose(0, 2, 1, 3)
    k = lin(x, params["wk"], params["bk"]).reshape(B, S, num_heads, d).transpose(0, 2, 1, 3)
    v = lin(x, params["wv"], params["bv"]).reshape(B, S, num_heads, d).transpose(0, 2, 1, 3)

    scores = jnp.einsum("bhqd,bhkd->bhqk", q, k) / math.sqrt(d)
    scores = scores + attention_mask
    probs = jax.nn.softmax(scores, axis=-1)
    ctx = jnp.einsum("bhqk,bhkd->bhqd", probs, v)
    ctx = ctx.transpose(0, 2, 1, 3).reshape(B, S, H)

    dense = lin(ctx, params["wo"], params["bo"])
    res = dense + x
    mean = jnp.mean(res, axis=-1, keepdims=True)
    var = jnp.mean((res - mean) ** 2, axis=-1, keepdims=True)
    normed = (res - mean) * jax.lax.rsqrt(var + eps)
    return normed * params["gamma"][0] + params["beta"][0]


if __name__ == "__main__":
    # Small config consistent with the module: hidden_size=32, num_attention_heads=4,
    # batch=2, seq=8, absolute position embeddings, eval mode (dropout off).
    B, S, H = 2, 8, 32
    NUM_HEADS = 4
    EPS = 1e-12

    key = jax.random.PRNGKey(0)
    keys = jax.random.split(key, 10)

    def w_init(k, shape, scale=0.05):
        return (scale * jax.random.normal(k, shape)).astype(jnp.float32)

    params = {
        "wq": w_init(keys[0], (H, H)), "bq": w_init(keys[1], (1, H)),
        "wk": w_init(keys[2], (H, H)), "bk": w_init(keys[3], (1, H)),
        "wv": w_init(keys[4], (H, H)), "bv": w_init(keys[5], (1, H)),
        "wo": w_init(keys[6], (H, H)), "bo": w_init(keys[7], (1, H)),
        "gamma": jnp.ones((1, H), jnp.float32),   # nn.LayerNorm default init
        "beta": jnp.zeros((1, H), jnp.float32),
    }

    x = jax.random.normal(keys[8], (B, S, H), dtype=jnp.float32)
    # HF-style additive attention mask; mask out the last key position of batch 1.
    attention_mask = jnp.zeros((B, 1, S, S), dtype=jnp.float32)
    attention_mask = attention_mask.at[1, 0, :, -1].set(-10000.0)

    ref = _reference(x, attention_mask, params, num_heads=NUM_HEADS, eps=EPS)

    # f32 compute path (strict parity check; exact softmax divide on this path).
    out_f32 = euclidean_attention(x, attention_mask, params, num_heads=NUM_HEADS, eps=EPS,
                                  compute_dtype=jnp.float32)
    out_f32 = jax.block_until_ready(out_f32)
    assert out_f32.shape == (B, S, H)
    assert jnp.allclose(out_f32, ref, atol=5e-3, rtol=5e-3), "f32 Pallas output mismatch"

    # bf16-MXU path (default): looser tolerance for bf16 matmul operands + approx reciprocal.
    out_bf16 = euclidean_attention(x, attention_mask, params, num_heads=NUM_HEADS, eps=EPS,
                                   compute_dtype=jnp.bfloat16)
    out_bf16 = jax.block_until_ready(out_bf16)
    assert out_bf16.shape == (B, S, H)
    assert jnp.allclose(out_bf16, ref, atol=5e-2, rtol=5e-2), "bf16 Pallas output mismatch"

    print("KERNEL_OK")
</pallas_src>

<mosaic_0001>
module attributes {stable_mosaic.version = 11 : i64} {
  func.func @_qkv_projection_kernel(%arg0: i32, %arg1: memref<16x32xf32, #tpu.memory_space<vmem>>, %arg2: memref<32x96xf32, #tpu.memory_space<vmem>>, %arg3: memref<1x96xf32, #tpu.memory_space<vmem>>, %arg4: memref<16x32xf32, #tpu.memory_space<vmem>>, %arg5: memref<16x32xf32, #tpu.memory_space<vmem>>, %arg6: memref<16x32xf32, #tpu.memory_space<vmem>>) attributes {dimension_semantics = [#tpu.dimension_semantics<parallel>], iteration_bounds = array<i64: 1>, scalar_prefetch = 0 : i64, scratch_operands = 0 : i64, tpu.core_type = #tpu.core_type<tc>, window_params = [{transform_indices = @transform_0, window_bounds = array<i64: 16, 32>}, {pipeline_mode = #tpu.pipeline_mode<synchronous>, transform_indices = @transform_1, window_bounds = array<i64: 32, 96>}, {pipeline_mode = #tpu.pipeline_mode<synchronous>, transform_indices = @transform_2, window_bounds = array<i64: 1, 96>}, {transform_indices = @transform_3, window_bounds = array<i64: 16, 32>}, {transform_indices = @transform_4, window_bounds = array<i64: 16, 32>}, {transform_indices = @transform_5, window_bounds = array<i64: 16, 32>}]} {
    %c0 = arith.constant 0 : index
    %c0_0 = arith.constant 0 : index
    %0 = vector.load %arg1[%c0, %c0_0] : memref<16x32xf32, #tpu.memory_space<vmem>>, vector<16x32xf32>
    %c0_1 = arith.constant 0 : index
    %c0_2 = arith.constant 0 : index
    %1 = vector.load %arg2[%c0_1, %c0_2] : memref<32x96xf32, #tpu.memory_space<vmem>>, vector<32x96xf32>
    %cst = arith.constant dense<0.000000e+00> : vector<16x96xf32>
    %2 = tpu.matmul %0, %1, %cst {dimension_numbers = #tpu.dot_dimension_numbers<[1], [0], [0], [1], [0, 0, 1, 1], [], []>} : vector<16x32xf32>, vector<32x96xf32>, vector<16x96xf32> -> vector<16x96xf32>
    %c0_3 = arith.constant 0 : index
    %c0_4 = arith.constant 0 : index
    %3 = vector.load %arg3[%c0_3, %c0_4] : memref<1x96xf32, #tpu.memory_space<vmem>>, vector<1x96xf32>
    %4 = vector.shape_cast %3 : vector<1x96xf32> to vector<96xf32>
    %5 = vector.shape_cast %4 : vector<96xf32> to vector<1x96xf32>
    %6 = vector.broadcast %5 : vector<1x96xf32> to vector<16x96xf32>
    %7 = arith.addf %2, %6 : vector<16x96xf32>
    %8 = vector.extract_strided_slice %7 {offsets = [0, 0], sizes = [16, 32], strides = [1, 1]} : vector<16x96xf32> to vector<16x32xf32>
    %c0_5 = arith.constant 0 : index
    %c0_6 = arith.constant 0 : index
    %9 = vector.load %arg4[%c0_5, %c0_6] : memref<16x32xf32, #tpu.memory_space<vmem>>, vector<16x32xf32>
    tpu.vector_store %arg4[%c0_5, %c0_6], %8 {strides = array<i32>} : memref<16x32xf32, #tpu.memory_space<vmem>>, vector<16x32xf32>,
    %10 = vector.extract_strided_slice %7 {offsets = [0, 32], sizes = [16, 32], strides = [1, 1]} : vector<16x96xf32> to vector<16x32xf32>
    %c0_7 = arith.constant 0 : index
    %c0_8 = arith.constant 0 : index
    %11 = vector.load %arg5[%c0_7, %c0_8] : memref<16x32xf32, #tpu.memory_space<vmem>>, vector<16x32xf32>
    tpu.vector_store %arg5[%c0_7, %c0_8], %10 {strides = array<i32>} : memref<16x32xf32, #tpu.memory_space<vmem>>, vector<16x32xf32>,
    %12 = vector.extract_strided_slice %7 {offsets = [0, 64], sizes = [16, 32], strides = [1, 1]} : vector<16x96xf32> to vector<16x32xf32>
    %c0_9 = arith.constant 0 : index
    %c0_10 = arith.constant 0 : index
    %13 = vector.load %arg6[%c0_9, %c0_10] : memref<16x32xf32, #tpu.memory_space<vmem>>, vector<16x32xf32>
    tpu.vector_store %arg6[%c0_9, %c0_10], %12 {strides = array<i32>} : memref<16x32xf32, #tpu.memory_space<vmem>>, vector<16x32xf32>,
    return
  }
  func.func @transform_0(%arg0: i32) -> (i32, i32) {
    %c0_i32 = arith.constant 0 : i32
    %c0_i32_0 = arith.constant 0 : i32
    return %arg0, %c0_i32 : i32, i32
  }
  func.func @transform_1(%arg0: i32) -> (i32, i32) {
    %c0_i32 = arith.constant 0 : i32
    %c0_i32_0 = arith.constant 0 : i32
    %c0_i32_1 = arith.constant 0 : i32
    return %c0_i32, %c0_i32_0 : i32, i32
  }
  func.func @transform_2(%arg0: i32) -> (i32, i32) {
    %c0_i32 = arith.constant 0 : i32
    %c0_i32_0 = arith.constant 0 : i32
    %c0_i32_1 = arith.constant 0 : i32
    return %c0_i32, %c0_i32_0 : i32, i32
  }
  func.func @transform_3(%arg0: i32) -> (i32, i32) {
    %c0_i32 = arith.constant 0 : i32
    %c0_i32_0 = arith.constant 0 : i32
    return %arg0, %c0_i32 : i32, i32
  }
  func.func @transform_4(%arg0: i32) -> (i32, i32) {
    %c0_i32 = arith.constant 0 : i32
    %c0_i32_0 = arith.constant 0 : i32
    return %arg0, %c0_i32 : i32, i32
  }
  func.func @transform_5(%arg0: i32) -> (i32, i32) {
    %c0_i32 = arith.constant 0 : i32
    %c0_i32_0 = arith.constant 0 : i32
    return %arg0, %c0_i32 : i32, i32
  }
}

module attributes {stable_mosaic.version = 11 : i64} {
  func.func @_qkv_projection_kernel(%arg0: i32, %arg1: memref<16x32xf32, #tpu.memory_space<vmem>>, %arg2: memref<32x96xf32, #tpu.memory_space<vmem>>, %arg3: memref<1x96xf32, #tpu.memory_space<vmem>>, %arg4: memref<16x32xf32, #tpu.memory_space<vmem>>, %arg5: memref<16x32xf32, #tpu.memory_space<vmem>>, %arg6: memref<16x32xf32, #tpu.memory_space<vmem>>) attributes {dimension_semantics = [#tpu.dimension_semantics<parallel>], iteration_bounds = array<i64: 1>, scalar_prefetch = 0 : i64, scratch_operands = 0 : i64, tpu.core_type = #tpu.core_type<tc>, window_params = [{transform_indices = @transform_0, window_bounds = array<i64: 16, 32>}, {pipeline_mode = #tpu.pipeline_mode<synchronous>, transform_indices = @transform_1, window_bounds = array<i64: 32, 96>}, {pipeline_mode = #tpu.pipeline_mode<synchronous>, transform_indices = @transform_2, window_bounds = array<i64: 1, 96>}, {transform_indices = @transform_3, window_bounds = array<i64: 16, 32>}, {transform_indices = @transform_4, window_bounds = array<i64: 16, 32>}, {transform_indices = @transform_5, window_bounds = array<i64: 16, 32>}]} {
    %c0 = arith.constant 0 : index
    %c0_0 = arith.constant 0 : index
    %0 = vector.load %arg1[%c0, %c0_0] : memref<16x32xf32, #tpu.memory_space<vmem>>, vector<16x32xf32>
    %c0_1 = arith.constant 0 : index
    %c0_2 = arith.constant 0 : index
    %1 = vector.load %arg2[%c0_1, %c0_2] : memref<32x96xf32, #tpu.memory_space<vmem>>, vector<32x96xf32>
    %cst = arith.constant dense<0.000000e+00> : vector<16x96xf32>
    %2 = tpu.matmul %0, %1, %cst {dimension_numbers = #tpu.dot_dimension_numbers<[1], [0], [0], [1], [0, 0, 1, 1], [], []>} : vector<16x32xf32>, vector<32x96xf32>, vector<16x96xf32> -> vector<16x96xf32>
    %c0_3 = arith.constant 0 : index
    %c0_4 = arith.constant 0 : index
    %3 = vector.load %arg3[%c0_3, %c0_4] : memref<1x96xf32, #tpu.memory_space<vmem>>, vector<1x96xf32>
    %4 = vector.shape_cast %3 : vector<1x96xf32> to vector<96xf32>
    %5 = vector.shape_cast %4 : vector<96xf32> to vector<1x96xf32>
    %6 = vector.broadcast %5 : vector<1x96xf32> to vector<16x96xf32>
    %7 = arith.addf %2, %6 : vector<16x96xf32>
    %8 = vector.extract_strided_slice %7 {offsets = [0, 0], sizes = [16, 32], strides = [1, 1]} : vector<16x96xf32> to vector<16x32xf32>
    %c0_5 = arith.constant 0 : index
    %c0_6 = arith.constant 0 : index
    %9 = vector.load %arg4[%c0_5, %c0_6] : memref<16x32xf32, #tpu.memory_space<vmem>>, vector<16x32xf32>
    tpu.vector_store %arg4[%c0_5, %c0_6], %8 {strides = array<i32>} : memref<16x32xf32, #tpu.memory_space<vmem>>, vector<16x32xf32>,
    %10 = vector.extract_strided_slice %7 {offsets = [0, 32], sizes = [16, 32], strides = [1, 1]} : vector<16x96xf32> to vector<16x32xf32>
    %c0_7 = arith.constant 0 : index
    %c0_8 = arith.constant 0 : index
    %11 = vector.load %arg5[%c0_7, %c0_8] : memref<16x32xf32, #tpu.memory_space<vmem>>, vector<16x32xf32>
    tpu.vector_store %arg5[%c0_7, %c0_8], %10 {strides = array<i32>} : memref<16x32xf32, #tpu.memory_space<vmem>>, vector<16x32xf32>,
    %12 = vector.extract_strided_slice %7 {offsets = [0, 64], sizes = [16, 32], strides = [1, 1]} : vector<16x96xf32> to vector<16x32xf32>
    %c0_9 = arith.constant 0 : index
    %c0_10 = arith.constant 0 : index
    %13 = vector.load %arg6[%c0_9, %c0_10] : memref<16x32xf32, #tpu.memory_space<vmem>>, vector<16x32xf32>
    tpu.vector_store %arg6[%c0_9, %c0_10], %12 {strides = array<i32>} : memref<16x32xf32, #tpu.memory_space<vmem>>, vector<16x32xf32>,
    return
  }
  func.func @transform_0(%arg0: i32) -> (i32, i32) {
    %c0_i32 = arith.constant 0 : i32
    %c0_i32_0 = arith.constant 0 : i32
    return %arg0, %c0_i32 : i32, i32
  }
  func.func @transform_1(%arg0: i32) -> (i32, i32) {
    %c0_i32 = arith.constant 0 : i32
    %c0_i32_0 = arith.constant 0 : i32
    %c0_i32_1 = arith.constant 0 : i32
    return %c0_i32, %c0_i32_0 : i32, i32
  }
  func.func @transform_2(%arg0: i32) -> (i32, i32) {
    %c0_i32 = arith.constant 0 : i32
    %c0_i32_0 = arith.constant 0 : i32
    %c0_i32_1 = arith.constant 0 : i32
    return %c0_i32, %c0_i32_0 : i32, i32
  }
  func.func @transform_3(%arg0: i32) -> (i32, i32) {
    %c0_i32 = arith.constant 0 : i32
    %c0_i32_0 = arith.constant 0 : i32
    return %arg0, %c0_i32 : i32, i32
  }
  func.func @transform_4(%arg0: i32) -> (i32, i32) {
    %c0_i32 = arith.constant 0 : i32
    %c0_i32_0 = arith.constant 0 : i32
    return %arg0, %c0_i32 : i32, i32
  }
  func.func @transform_5(%arg0: i32) -> (i32, i32) {
    %c0_i32 = arith.constant 0 : i32
    %c0_i32_0 = arith.constant 0 : i32
    return %arg0, %c0_i32 : i32, i32
  }
}

</mosaic_0001>

<llo_original>
// kernel: tpu_custom_call.1
$region0: #{tpu_custom_call.1}
  #allocation0 [shape = 'u32[]', space=smem, size = 0x4, offset = 0x4, fixed_abs, tag = 'smem constant byte address 0x4 - core index']
  #allocation1 [shape = 'u32[144,128]{1,0:T(1,128)}', space=vmem, size = 0x12000, scoped, tag = 'internal scratch']
  %s0 = inlined_call_operand.hbm [shape: f32[16,32], index: 0, kind: input, shape index: {}]
  %s1 = inlined_call_operand.hbm [shape: f32[32,96], index: 1, kind: input, shape index: {}]
  %s2 = inlined_call_operand.vmem [shape: f32[1,96], index: 2, kind: input, shape index: {}]
  %s3 = inlined_call_operand.hbm [shape: f32[16,32], index: 3, kind: output, shape index: {0}]
  %s4 = inlined_call_operand.hbm [shape: f32[16,32], index: 4, kind: output, shape index: {1}]
  %s5 = inlined_call_operand.hbm [shape: f32[16,32], index: 5, kind: output, shape index: {2}]
  %6 = xla_tuple %s3, %s4, %s5
  %s7 = sld [smem:[#allocation0]]
  $region46: #{tpu_custom_call.1} parent=0
    _
  %s9 = ssub.s32 1, %s7
  %s10 = scalar_select 0, %s9, %s7
  $region1: #{tpu_custom_call.1} parent=0
    #allocation2 [shape = 'u8[8192]{0}', space=vmem, size = 0x2000, scoped, tag = 'input window, operand 0, single buffered']
    #allocation3 [shape = 's32[1]{0}', space=sflag, size = 0x4, scoped, tag = 'scoped memory for tpu_custom_call.1']
    #allocation4 [shape = 's32[1]{0}', space=sflag, size = 0x4, scoped, tag = 'scoped memory for tpu_custom_call.1']
    #allocation5 [shape = 'u8[16384]{0}', space=vmem, size = 0x4000, scoped, tag = 'input window, operand 1, single buffered']
    #allocation6 [shape = 's32[1]{0}', space=sflag, size = 0x4, scoped, tag = 'scoped memory for tpu_custom_call.1']
    #allocation7 [shape = 'u8[8192]{0}', space=vmem, size = 0x2000, scoped, tag = 'output window, operand 0, single buffered']
    #allocation8 [shape = 'u8[8192]{0}', space=vmem, size = 0x2000, scoped, tag = 'output window, operand 1, single buffered']
    #allocation9 [shape = 's32[1]{0}', space=sflag, size = 0x4, scoped, tag = 'scoped memory for tpu_custom_call.1']
    #allocation10 [shape = 'u8[8192]{0}', space=vmem, size = 0x2000, scoped, tag = 'output window, operand 2, single buffered']
    %11 = vsyncpa [#allocation3], 0
    %12 = vsyncpa [#allocation6], 0
    %13 = vsyncpa [#allocation4], 0
    %14 = vsyncpa [#allocation9], 0
    // Predicated region
    $region2: #{tpu_custom_call.1} parent=1 // pred_check
      _
    $region3: #{tpu_custom_call.1} parent=1 // pred_check_branch
      %16 = sbr.rel (0) target = $region5
    $region4: #{tpu_custom_call.1} parent=1 // pred_region
      %s18 = ssub.s32 256, 256
      %19 = vsyncadd [#allocation3], %s18
      %s20 = sshll.u32 [#allocation2], 4
      %s21 = int_to_ptr.vmem [resolvable:$true] %s20
      %26 = dma.hbm_to_vmem [thread:$0]  %s0, 256, %s21, [#allocation3], 128, 128, 8
    $region5: #{tpu_custom_call.1} parent=1 // pred_fallthru
      _
    // Predicated region
    $region6: #{tpu_custom_call.1} parent=1 // pred_check
      _
    $region7: #{tpu_custom_call.1} parent=1 // pred_check_branch
      %28 = sbr.rel (0) target = $region9
    $region8: #{tpu_custom_call.1} parent=1 // pred_region
      %s30 = ssub.s32 512, 512
      %31 = vsyncadd [#allocation6], %s30
      %s32 = sshll.u32 [#allocation5], 4
      %s33 = int_to_ptr.vmem [resolvable:$true] %s32
      %38 = dma.hbm_to_vmem [thread:$0]  %s1, 512, %s33, [#allocation6], 128, 128, 8
    $region9: #{tpu_custom_call.1} parent=1 // pred_fallthru
      _
    // Predicated region
    $region10: #{tpu_custom_call.1} parent=1 // pred_check
      _
    $region11: #{tpu_custom_call.1} parent=1 // pred_check_branch
      %40 = sbr.rel (0) target = $region13
    $region12: #{tpu_custom_call.1} parent=1 // pred_region
      _
    $region13: #{tpu_custom_call.1} parent=1 // pred_fallthru
      _
    // Predicated region
    $region14: #{tpu_custom_call.1} parent=1 // pred_check
      _
    $region15: #{tpu_custom_call.1} parent=1 // pred_check_branch
      %42 = sbr.rel (0) target = $region17
    $region16: #{tpu_custom_call.1} parent=1 // pred_region
      %43 = dma.done [#allocation3], 256
    $region17: #{tpu_custom_call.1} parent=1 // pred_fallthru
      _
    // Predicated region
    $region18: #{tpu_custom_call.1} parent=1 // pred_check
      _
    $region19: #{tpu_custom_call.1} parent=1 // pred_check_branch
      %45 = sbr.rel (0) target = $region21
    $region20: #{tpu_custom_call.1} parent=1 // pred_region
      %46 = dma.done [#allocation6], 512
    $region21: #{tpu_custom_call.1} parent=1 // pred_fallthru
      _
    %v47 = vld [vmem:[#allocation2] sm:$0xff]
    %v48 = vld [vmem:[#allocation2 + $0x8] sm:$0xff]
    %v49 = vld [vmem:[#allocation5] sm:$0xff]
    %v50 = vld [vmem:[#allocation5 + $0x8] sm:$0xff]
    %v51 = vld [vmem:[#allocation5 + $0x10] sm:$0xff]
    %v52 = vld [vmem:[#allocation5 + $0x18] sm:$0xff]
    %v53 = vld [vmem:[%s2] sm:$0x1]
    %v55 = vlaneseq
    %v56 = vshrl.u32 %v55, 7
    %v57 = vsub.s32 0, %v56
    %v58 = vrot.slane %v53, %v57
    %vm60 = vcmask 261120
    %v62 = vsel %vm60, %v47, 0
    %v65 = vsel %vm60, %v48, 0
    %67 = vmatprep.subr.mxu0 0.0
    %68 = vmatpush1.msra.mxu0 %v49
    %69 = vmatprep.subr.mxu0 0.0
    %70 = vmatpush1.msra.mxu0 %v50
    %71 = vmatprep.subr.mxu0 0.0
    %72 = vmatpush1.msra.mxu0 %v51
    %73 = vmatprep.subr.mxu0 0.0
    %74 = vmatpush1.msra.mxu0 %v52
    %75 = vmatprep.subr.mxu0 0.0
    %76 = vmatpush1.msra.mxu0 0.0
    %77 = vmatprep.subr.mxu0 0.0
    %78 = vmatpush1.msra.mxu0 0.0
    %79 = vmatprep.subr.mxu0 0.0
    %80 = vmatpush1.msra.mxu0 0.0
    %81 = vmatprep.subr.mxu0 0.0
    %82 = vmatpush1.msra.mxu0 0.0
    %83 = vmatprep.subr.mxu0 0.0
    %84 = vmatpush1.msra.mxu0 0.0
    %85 = vmatprep.subr.mxu0 0.0
    %86 = vmatpush1.msra.mxu0 0.0
    %87 = vmatprep.subr.mxu0 0.0
    %88 = vmatpush1.msra.mxu0 0.0
    %89 = vmatprep.subr.mxu0 0.0
    %90 = vmatpush1.msra.mxu0 0.0
    %91 = vmatprep.subr.mxu0 0.0
    %92 = vmatpush1.msra.mxu0 0.0
    %93 = vmatprep.subr.mxu0 0.0
    %94 = vmatpush1.msra.mxu0 0.0
    %95 = vmatprep.subr.mxu0 0.0
    %96 = vmatpush1.msra.mxu0 0.0
    %97 = vmatprep.subr.mxu0 0.0
    %98 = vmatpush1.msra.mxu0 0.0
    %99 = vmatprep.subr.mxu0 0.0
    %100 = vmatpush1.msra.mxu0 0.0
    %101 = vmatprep.subr.mxu0 0.0
    %102 = vmatpush1.msra.mxu0 0.0
    %103 = vmatprep.subr.mxu0 0.0
    %104 = vmatpush1.msra.mxu0 0.0
    %105 = vmatprep.subr.mxu0 0.0
    %106 = vmatpush1.msra.mxu0 0.0
    %107 = vmatprep.subr.mxu0 0.0
    %108 = vmatpush1.msra.mxu0 0.0
    %109 = vmatprep.subr.mxu0 0.0
    %110 = vmatpush1.msra.mxu0 0.0
    %111 = vmatprep.subr.mxu0 0.0
    %112 = vmatpush1.msra.mxu0 0.0
    %113 = vmatprep.subr.mxu0 0.0
    %114 = vmatpush1.msra.mxu0 0.0
    %115 = vmatprep.subr.mxu0 0.0
    %116 = vmatpush1.msra.mxu0 0.0
    %117 = vmatprep.subr.mxu0 0.0
    %118 = vmatpush1.msra.mxu0 0.0
    %119 = vmatprep.subr.mxu0 0.0
    %120 = vmatpush1.msra.mxu0 0.0
    %121 = vmatprep.subr.mxu0 0.0
    %122 = vmatpush1.msra.mxu0 0.0
    %123 = vmatprep.subr.mxu0 0.0
    %124 = vmatpush1.msra.mxu0 0.0
    %125 = vmatprep.subr.mxu0 0.0
    %126 = vmatpush1.msra.mxu0 0.0
    %127 = vmatprep.subr.mxu0 0.0
    %128 = vmatpush1.msra.mxu0 0.0
    %129 = vmatprep.subr.mxu0 0.0
    %130 = vmatpush1.msra.mxu0 0.0
    %131 = vmatprep.mubr.f32.mxu0 0.0
    %132 = vmatmul.mubr.f32.gmra.mrb[0].mxu0 %v62
    %v133 = vpop.f32.mrb[0].mxu0
    %v134 = vadd.f32 %v58, %v133
    %v135 = vpop.f32.mrb[0].mxu0
    %136 = vmatprep.mubr.f32.mxu0 0.0
    %137 = vmatmul.mubr.f32.gmra.mrb[0].mxu0 %v65
    %v138 = vpop.f32.mrb[0].mxu0
    %v139 = vadd.f32 %v58, %v138
    %v140 = vpop.f32.mrb[0].mxu0
    %141 = vdwg.mxu0
    %142 = vst.msk [vmem:[#allocation7] sm:$0xff] %vm60, %v134
    %143 = vst.msk [vmem:[#allocation7 + $0x8] sm:$0xff] %vm60, %v139
    %146 = vrot.lane.b32.xlu0 %v134, 96
    %v147 = vpop.permute.xlu0 %146
    %148 = vrot.lane.b32.xlu0 %v139, 96
    %v149 = vpop.permute.xlu0 %148
    %152 = vst.msk [vmem:[#allocation8] sm:$0xff] %vm60, %v147
    %153 = vst.msk [vmem:[#allocation8 + $0x8] sm:$0xff] %vm60, %v149
    %154 = vrot.lane.b32.xlu0 %v134, 64
    %v155 = vpop.permute.xlu0 %154
    %156 = vrot.lane.b32.xlu0 %v139, 64
    %v157 = vpop.permute.xlu0 %156
    %160 = vst.msk [vmem:[#allocation10] sm:$0xff] %vm60, %v155
    %161 = vst.msk [vmem:[#allocation10 + $0x8] sm:$0xff] %vm60, %v157
    // Predicated region
    $region22: #{tpu_custom_call.1} parent=1 // pred_check
      _
    $region23: #{tpu_custom_call.1} parent=1 // pred_check_branch
      %163 = sbr.rel (0) target = $region25
    $region24: #{tpu_custom_call.1} parent=1 // pred_region
      %s165 = ssub.s32 256, 256
      %166 = vsyncadd [#allocation4], %s165
      %s167 = sshll.u32 [#allocation7], 4
      %s168 = int_to_ptr.vmem [resolvable:$true] %s167
      %173 = dma.vmem_to_hbm [thread:$0]  %s168, 256, %s3, [#allocation4], 128, 128, 8
    $region25: #{tpu_custom_call.1} parent=1 // pred_fallthru
      _
    // Predicated region
    $region26: #{tpu_custom_call.1} parent=1 // pred_check
      _
    $region27: #{tpu_custom_call.1} parent=1 // pred_check_branch
      %175 = sbr.rel (0) target = $region29
    $region28: #{tpu_custom_call.1} parent=1 // pred_region
      %s177 = ssub.s32 256, 256
      %178 = vsyncadd [#allocation9], %s177
      %s179 = sshll.u32 [#allocation8], 4
      %s180 = int_to_ptr.vmem [resolvable:$true] %s179
      %185 = dma.vmem_to_hbm [thread:$0]  %s180, 256, %s4, [#allocation9], 128, 128, 8
    $region29: #{tpu_custom_call.1} parent=1 // pred_fallthru
      _
    // Predicated region
    $region30: #{tpu_custom_call.1} parent=1 // pred_check
      _
    $region31: #{tpu_custom_call.1} parent=1 // pred_check_branch
      %187 = sbr.rel (0) target = $region33
    $region32: #{tpu_custom_call.1} parent=1 // pred_region
      %s189 = ssub.s32 256, 256
      %190 = vsyncadd [#allocation9], %s189
      %s191 = sshll.u32 [#allocation10], 4
      %s192 = int_to_ptr.vmem [resolvable:$true] %s191
      %197 = dma.vmem_to_hbm [thread:$0]  %s192, 256, %s5, [#allocation9], 128, 128, 8
    $region33: #{tpu_custom_call.1} parent=1 // pred_fallthru
      _
    // Predicated region
    $region34: #{tpu_custom_call.1} parent=1 // pred_check
      _
    $region35: #{tpu_custom_call.1} parent=1 // pred_check_branch
      %199 = sbr.rel (0) target = $region37
    $region36: #{tpu_custom_call.1} parent=1 // pred_region
      %200 = dma.done [#allocation4], 256
    $region37: #{tpu_custom_call.1} parent=1 // pred_fallthru
      _
    // Predicated region
    $region38: #{tpu_custom_call.1} parent=1 // pred_check
      _
    $region39: #{tpu_custom_call.1} parent=1 // pred_check_branch
      %202 = sbr.rel (0) target = $region41
    $region40: #{tpu_custom_call.1} parent=1 // pred_region
      %203 = dma.done [#allocation9], 256
    $region41: #{tpu_custom_call.1} parent=1 // pred_fallthru
      _
    // Predicated region
    $region42: #{tpu_custom_call.1} parent=1 // pred_check
      _
    $region43: #{tpu_custom_call.1} parent=1 // pred_check_branch
      %205 = sbr.rel (0) target = $region45
    $region44: #{tpu_custom_call.1} parent=1 // pred_region
      %206 = dma.done [#allocation9], 256
    $region45: #{tpu_custom_call.1} parent=1 // pred_fallthru
      _
    %207 = vsyncpa [#allocation3], 1
    %208 = vsyncpa [#allocation6], 1
    %209 = vsyncpa [#allocation4], 1
    %210 = vsyncpa [#allocation9], 1

// kernel: tpu_custom_call.1
$region0: #{tpu_custom_call.1}
  #allocation0 [shape = 'u32[]', space=smem, size = 0x4, offset = 0x4, fixed_abs, tag = 'smem constant byte address 0x4 - core index']
  #allocation1 [shape = 'u32[144,128]{1,0:T(1,128)}', space=vmem, size = 0x12000, scoped, tag = 'internal scratch']
  %s0 = inlined_call_operand.hbm [shape: f32[16,32], index: 0, kind: input, shape index: {}]
  %s1 = inlined_call_operand.hbm [shape: f32[32,96], index: 1, kind: input, shape index: {}]
  %s2 = inlined_call_operand.vmem [shape: f32[1,96], index: 2, kind: input, shape index: {}]
  %s3 = inlined_call_operand.hbm [shape: f32[16,32], index: 3, kind: output, shape index: {0}]
  %s4 = inlined_call_operand.hbm [shape: f32[16,32], index: 4, kind: output, shape index: {1}]
  %s5 = inlined_call_operand.hbm [shape: f32[16,32], index: 5, kind: output, shape index: {2}]
  %6 = xla_tuple %s3, %s4, %s5
  %s7 = sld [smem:[#allocation0]]
  $region46: #{tpu_custom_call.1} parent=0
    _
  %s9 = ssub.s32 1, %s7
  %s10 = scalar_select 0, %s9, %s7
  $region1: #{tpu_custom_call.1} parent=0
    #allocation2 [shape = 'u8[8192]{0}', space=vmem, size = 0x2000, scoped, tag = 'input window, operand 0, single buffered']
    #allocation3 [shape = 's32[1]{0}', space=sflag, size = 0x4, scoped, tag = 'scoped memory for tpu_custom_call.1']
    #allocation4 [shape = 's32[1]{0}', space=sflag, size = 0x4, scoped, tag = 'scoped memory for tpu_custom_call.1']
    #allocation5 [shape = 'u8[16384]{0}', space=vmem, size = 0x4000, scoped, tag = 'input window, operand 1, single buffered']
    #allocation6 [shape = 's32[1]{0}', space=sflag, size = 0x4, scoped, tag = 'scoped memory for tpu_custom_call.1']
    #allocation7 [shape = 'u8[8192]{0}', space=vmem, size = 0x2000, scoped, tag = 'output window, operand 0, single buffered']
    #allocation8 [shape = 'u8[8192]{0}', space=vmem, size = 0x2000, scoped, tag = 'output window, operand 1, single buffered']
    #allocation9 [shape = 's32[1]{0}', space=sflag, size = 0x4, scoped, tag = 'scoped memory for tpu_custom_call.1']
    #allocation10 [shape = 'u8[8192]{0}', space=vmem, size = 0x2000, scoped, tag = 'output window, operand 2, single buffered']
    %11 = vsyncpa [#allocation3], 0
    %12 = vsyncpa [#allocation6], 0
    %13 = vsyncpa [#allocation4], 0
    %14 = vsyncpa [#allocation9], 0
    // Predicated region
    $region2: #{tpu_custom_call.1} parent=1 // pred_check
      _
    $region3: #{tpu_custom_call.1} parent=1 // pred_check_branch
      %16 = sbr.rel (0) target = $region5
    $region4: #{tpu_custom_call.1} parent=1 // pred_region
      %s18 = ssub.s32 256, 256
      %19 = vsyncadd [#allocation3], %s18
      %s20 = sshll.u32 [#allocation2], 4
      %s21 = int_to_ptr.vmem [resolvable:$true] %s20
      %26 = dma.hbm_to_vmem [thread:$0]  %s0, 256, %s21, [#allocation3], 128, 128, 8
    $region5: #{tpu_custom_call.1} parent=1 // pred_fallthru
      _
    // Predicated region
    $region6: #{tpu_custom_call.1} parent=1 // pred_check
      _
    $region7: #{tpu_custom_call.1} parent=1 // pred_check_branch
      %28 = sbr.rel (0) target = $region9
    $region8: #{tpu_custom_call.1} parent=1 // pred_region
      %s30 = ssub.s32 512, 512
      %31 = vsyncadd [#allocation6], %s30
      %s32 = sshll.u32 [#allocation5], 4
      %s33 = int_to_ptr.vmem [resolvable:$true] %s32
      %38 = dma.hbm_to_vmem [thread:$0]  %s1, 512, %s33, [#allocation6], 128, 128, 8
    $region9: #{tpu_custom_call.1} parent=1 // pred_fallthru
      _
    // Predicated region
    $region10: #{tpu_custom_call.1} parent=1 // pred_check
      _
    $region11: #{tpu_custom_call.1} parent=1 // pred_check_branch
      %40 = sbr.rel (0) target = $region13
    $region12: #{tpu_custom_call.1} parent=1 // pred_region
      _
    $region13: #{tpu_custom_call.1} parent=1 // pred_fallthru
      _
    // Predicated region
    $region14: #{tpu_custom_call.1} parent=1 // pred_check
      _
    $region15: #{tpu_custom_call.1} parent=1 // pred_check_branch
      %42 = sbr.rel (0) target = $region17
    $region16: #{tpu_custom_call.1} parent=1 // pred_region
      %43 = dma.done [#allocation3], 256
    $region17: #{tpu_custom_call.1} parent=1 // pred_fallthru
      _
    // Predicated region
    $region18: #{tpu_custom_call.1} parent=1 // pred_check
      _
    $region19: #{tpu_custom_call.1} parent=1 // pred_check_branch
      %45 = sbr.rel (0) target = $region21
    $region20: #{tpu_custom_call.1} parent=1 // pred_region
      %46 = dma.done [#allocation6], 512
    $region21: #{tpu_custom_call.1} parent=1 // pred_fallthru
      _
    %v47 = vld [vmem:[#allocation2] sm:$0xff]
    %v48 = vld [vmem:[#allocation2 + $0x8] sm:$0xff]
    %v49 = vld [vmem:[#allocation5] sm:$0xff]
    %v50 = vld [vmem:[#allocation5 + $0x8] sm:$0xff]
    %v51 = vld [vmem:[#allocation5 + $0x10] sm:$0xff]
    %v52 = vld [vmem:[#allocation5 + $0x18] sm:$0xff]
    %v53 = vld [vmem:[%s2] sm:$0x1]
    %v55 = vlaneseq
    %v56 = vshrl.u32 %v55, 7
    %v57 = vsub.s32 0, %v56
    %v58 = vrot.slane %v53, %v57
    %vm60 = vcmask 261120
    %v62 = vsel %vm60, %v47, 0
    %v65 = vsel %vm60, %v48, 0
    %67 = vmatprep.subr.mxu0 0.0
    %68 = vmatpush1.msra.mxu0 %v49
    %69 = vmatprep.subr.mxu0 0.0
    %70 = vmatpush1.msra.mxu0 %v50
    %71 = vmatprep.subr.mxu0 0.0
    %72 = vmatpush1.msra.mxu0 %v51
    %73 = vmatprep.subr.mxu0 0.0
    %74 = vmatpush1.msra.mxu0 %v52
    %75 = vmatprep.subr.mxu0 0.0
    %76 = vmatpush1.msra.mxu0 0.0
    %77 = vmatprep.subr.mxu0 0.0
    %78 = vmatpush1.msra.mxu0 0.0
    %79 = vmatprep.subr.mxu0 0.0
    %80 = vmatpush1.msra.mxu0 0.0
    %81 = vmatprep.subr.mxu0 0.0
    %82 = vmatpush1.msra.mxu0 0.0
    %83 = vmatprep.subr.mxu0 0.0
    %84 = vmatpush1.msra.mxu0 0.0
    %85 = vmatprep.subr.mxu0 0.0
    %86 = vmatpush1.msra.mxu0 0.0
    %87 = vmatprep.subr.mxu0 0.0
    %88 = vmatpush1.msra.mxu0 0.0
    %89 = vmatprep.subr.mxu0 0.0
    %90 = vmatpush1.msra.mxu0 0.0
    %91 = vmatprep.subr.mxu0 0.0
    %92 = vmatpush1.msra.mxu0 0.0
    %93 = vmatprep.subr.mxu0 0.0
    %94 = vmatpush1.msra.mxu0 0.0
    %95 = vmatprep.subr.mxu0 0.0
    %96 = vmatpush1.msra.mxu0 0.0
    %97 = vmatprep.subr.mxu0 0.0
    %98 = vmatpush1.msra.mxu0 0.0
    %99 = vmatprep.subr.mxu0 0.0
    %100 = vmatpush1.msra.mxu0 0.0
    %101 = vmatprep.subr.mxu0 0.0
    %102 = vmatpush1.msra.mxu0 0.0
    %103 = vmatprep.subr.mxu0 0.0
    %104 = vmatpush1.msra.mxu0 0.0
    %105 = vmatprep.subr.mxu0 0.0
    %106 = vmatpush1.msra.mxu0 0.0
    %107 = vmatprep.subr.mxu0 0.0
    %108 = vmatpush1.msra.mxu0 0.0
    %109 = vmatprep.subr.mxu0 0.0
    %110 = vmatpush1.msra.mxu0 0.0
    %111 = vmatprep.subr.mxu0 0.0
    %112 = vmatpush1.msra.mxu0 0.0
    %113 = vmatprep.subr.mxu0 0.0
    %114 = vmatpush1.msra.mxu0 0.0
    %115 = vmatprep.subr.mxu0 0.0
    %116 = vmatpush1.msra.mxu0 0.0
    %117 = vmatprep.subr.mxu0 0.0
    %118 = vmatpush1.msra.mxu0 0.0
    %119 = vmatprep.subr.mxu0 0.0
    %120 = vmatpush1.msra.mxu0 0.0
    %121 = vmatprep.subr.mxu0 0.0
    %122 = vmatpush1.msra.mxu0 0.0
    %123 = vmatprep.subr.mxu0 0.0
    %124 = vmatpush1.msra.mxu0 0.0
    %125 = vmatprep.subr.mxu0 0.0
    %126 = vmatpush1.msra.mxu0 0.0
    %127 = vmatprep.subr.mxu0 0.0
    %128 = vmatpush1.msra.mxu0 0.0
    %129 = vmatprep.subr.mxu0 0.0
    %130 = vmatpush1.msra.mxu0 0.0
    %131 = vmatprep.mubr.f32.mxu0 0.0
    %132 = vmatmul.mubr.f32.gmra.mrb[0].mxu0 %v62
    %v133 = vpop.f32.mrb[0].mxu0
    %v134 = vadd.f32 %v58, %v133
    %v135 = vpop.f32.mrb[0].mxu0
    %136 = vmatprep.mubr.f32.mxu0 0.0
    %137 = vmatmul.mubr.f32.gmra.mrb[0].mxu0 %v65
    %v138 = vpop.f32.mrb[0].mxu0
    %v139 = vadd.f32 %v58, %v138
    %v140 = vpop.f32.mrb[0].mxu0
    %141 = vdwg.mxu0
    %142 = vst.msk [vmem:[#allocation7] sm:$0xff] %vm60, %v134
    %143 = vst.msk [vmem:[#allocation7 + $0x8] sm:$0xff] %vm60, %v139
    %146 = vrot.lane.b32.xlu0 %v134, 96
    %v147 = vpop.permute.xlu0 %146
    %148 = vrot.lane.b32.xlu0 %v139, 96
    %v149 = vpop.permute.xlu0 %148
    %152 = vst.msk [vmem:[#allocation8] sm:$0xff] %vm60, %v147
    %153 = vst.msk [vmem:[#allocation8 + $0x8] sm:$0xff] %vm60, %v149
    %154 = vrot.lane.b32.xlu0 %v134, 64
    %v155 = vpop.permute.xlu0 %154
    %156 = vrot.lane.b32.xlu0 %v139, 64
    %v157 = vpop.permute.xlu0 %156
    %160 = vst.msk [vmem:[#allocation10] sm:$0xff] %vm60, %v155
    %161 = vst.msk [vmem:[#allocation10 + $0x8] sm:$0xff] %vm60, %v157
    // Predicated region
    $region22: #{tpu_custom_call.1} parent=1 // pred_check
      _
    $region23: #{tpu_custom_call.1} parent=1 // pred_check_branch
      %163 = sbr.rel (0) target = $region25
    $region24: #{tpu_custom_call.1} parent=1 // pred_region
      %s165 = ssub.s32 256, 256
      %166 = vsyncadd [#allocation4], %s165
      %s167 = sshll.u32 [#allocation7], 4
      %s168 = int_to_ptr.vmem [resolvable:$true] %s167
      %173 = dma.vmem_to_hbm [thread:$0]  %s168, 256, %s3, [#allocation4], 128, 128, 8
    $region25: #{tpu_custom_call.1} parent=1 // pred_fallthru
      _
    // Predicated region
    $region26: #{tpu_custom_call.1} parent=1 // pred_check
      _
    $region27: #{tpu_custom_call.1} parent=1 // pred_check_branch
      %175 = sbr.rel (0) target = $region29
    $region28: #{tpu_custom_call.1} parent=1 // pred_region
      %s177 = ssub.s32 256, 256
      %178 = vsyncadd [#allocation9], %s177
      %s179 = sshll.u32 [#allocation8], 4
      %s180 = int_to_ptr.vmem [resolvable:$true] %s179
      %185 = dma.vmem_to_hbm [thread:$0]  %s180, 256, %s4, [#allocation9], 128, 128, 8
    $region29: #{tpu_custom_call.1} parent=1 // pred_fallthru
      _
    // Predicated region
    $region30: #{tpu_custom_call.1} parent=1 // pred_check
      _
    $region31: #{tpu_custom_call.1} parent=1 // pred_check_branch
      %187 = sbr.rel (0) target = $region33
    $region32: #{tpu_custom_call.1} parent=1 // pred_region
      %s189 = ssub.s32 256, 256
      %190 = vsyncadd [#allocation9], %s189
      %s191 = sshll.u32 [#allocation10], 4
      %s192 = int_to_ptr.vmem [resolvable:$true] %s191
      %197 = dma.vmem_to_hbm [thread:$0]  %s192, 256, %s5, [#allocation9], 128, 128, 8
    $region33: #{tpu_custom_call.1} parent=1 // pred_fallthru
      _
    // Predicated region
    $region34: #{tpu_custom_call.1} parent=1 // pred_check
      _
    $region35: #{tpu_custom_call.1} parent=1 // pred_check_branch
      %199 = sbr.rel (0) target = $region37
    $region36: #{tpu_custom_call.1} parent=1 // pred_region
      %200 = dma.done [#allocation4], 256
    $region37: #{tpu_custom_call.1} parent=1 // pred_fallthru
      _
    // Predicated region
    $region38: #{tpu_custom_call.1} parent=1 // pred_check
      _
    $region39: #{tpu_custom_call.1} parent=1 // pred_check_branch
      %202 = sbr.rel (0) target = $region41
    $region40: #{tpu_custom_call.1} parent=1 // pred_region
      %203 = dma.done [#allocation9], 256
    $region41: #{tpu_custom_call.1} parent=1 // pred_fallthru
      _
    // Predicated region
    $region42: #{tpu_custom_call.1} parent=1 // pred_check
      _
    $region43: #{tpu_custom_call.1} parent=1 // pred_check_branch
      %205 = sbr.rel (0) target = $region45
    $region44: #{tpu_custom_call.1} parent=1 // pred_region
      %206 = dma.done [#allocation9], 256
    $region45: #{tpu_custom_call.1} parent=1 // pred_fallthru
      _
    %207 = vsyncpa [#allocation3], 1
    %208 = vsyncpa [#allocation6], 1
    %209 = vsyncpa [#allocation4], 1
    %210 = vsyncpa [#allocation9], 1

</llo_original>
